<compile_context>
chip_gen: v5e
topology: v5e:2x2
jax: 0.10.0
libtpu: 0.0.40
codegen_flags: <defaults>
</compile_context>

<pallas_src>
import functools

import jax
import jax.numpy as jnp
import numpy as np
from jax import lax
from jax.experimental import pallas as pl
from jax.experimental.pallas import tpu as pltpu

_EPS = 1e-12        # F.normalize default eps
_DEN_GUARD = 1e-30  # segment-softmax denominator guard (>= f32 min normal; TPU flushes subnormals)


def make_routing_kernel(init_mtd, attention, beta, is_xNorm, max_iter, ew_dtype):
    """Build the Pallas kernel body with static routing hyper-parameters.

    ew_dtype: dtype for the bulk (E, d) elementwise work (bf16 on v6e/v7x, f32 on v5e).
    """
    bf16, f32 = jnp.bfloat16, jnp.float32
    ew = ew_dtype

    def kernel(*refs):
        if init_mtd == 0:
            row_ref, x_col_ref, x_init_ref, ppr_ref, invdeg_ref, ggt_ref, out_ref = refs
        else:
            row_ref, x_col_ref, ppr_ref, invdeg_ref, ggt_ref, out_ref = refs
            x_init_ref = None

        E, d = x_col_ref.shape
        N = out_ref.shape[0]

        # Edge -> row one-hot scatter/gather matrix, built in-kernel from row_idx (VPU compare
        # against a lane iota).  No (E, N) HBM DMA; 0/1 are exact in bf16.
        row = row_ref[...]                                              # (E, 1) int32
        R = (lax.broadcasted_iota(jnp.int32, (E, N), 1) == row).astype(bf16)

        GGt = ggt_ref[...]                                              # (d, d) bf16 block-diag
        inv_deg = invdeg_ref[...]                                       # (N, 1) f32, 1/max(deg,1)
        x_col = x_col_ref[...]                                          # (E, d) f32

        def mm(a, b):
            # a @ b on the MXU, bf16 operands, f32 accumulation.
            return jnp.dot(a.astype(bf16), b.astype(bf16), preferred_element_type=f32)

        def mm_t(a, b):
            # a.T @ b, contracting the major E axis directly (no transposed copy of R).
            return lax.dot_general(a.astype(bf16), b.astype(bf16),
                                   dimension_numbers=(((0,), (0,)), ((), ())),
                                   preferred_element_type=f32)

        def caps_norm(v):
            # Per-capsule L2 normalize in replicated (rows, d) space; returns f32.
            v = v.astype(ew)
            nrm2 = mm(v * v, GGt)                       # per-capsule |v|^2 replicated over d, f32
            return v.astype(f32) * lax.rsqrt(jnp.maximum(nrm2, _EPS * _EPS))

        def seg_softmax(p, stabilize):
            # Exact segment softmax over edges sharing a row_idx, in replicated (E, d) space.
            # Stabilizer = per-segment mean (any per-segment constant is mathematically exact):
            # no whole-segment underflow; overflow only if intra-segment spread > ~88.
            p32 = p.astype(f32)
            if stabilize:
                seg_mean = mm_t(R, p) * inv_deg         # (N, d)
                c = mm(R, seg_mean)                     # (E, d) gathered, consistent per segment
                e = jnp.exp(p32 - c).astype(ew)
            else:
                # Caller guarantees bounded, non-negative logits (beta*softmax + (1-beta)*ppr).
                e = jnp.exp(p32).astype(ew)
            den = mm(R, mm_t(R, e))                     # per-segment sums gathered back  (E, d)
            inv = pl.reciprocal(jnp.maximum(den, _DEN_GUARD), approx=True)
            return e * inv.astype(ew)                   # routing weights, replicated over d

        if is_xNorm:
            x_col = caps_norm(x_col)
        x_col = x_col.astype(ew)

        ppr = ppr_ref[...]                              # (E, 1) f32
        if init_mtd == 0:
            u0 = x_init_ref[...]                        # x_nb[x_idx]
            if is_xNorm:
                u0 = caps_norm(u0)                      # row-wise, commutes with the gather
            u0 = u0.astype(f32)
        elif init_mtd == 1:
            u0 = mm_t(R, x_col)                         # scatter-sum                (N, d) f32
        else:
            u0 = mm_t(R, x_col * ppr.astype(ew))        # ppr-weighted scatter-sum   (N, d) f32

        # Loop-invariant broadcast, hoisted out of the routing loop (JAX does not CSE it).
        ppr_b = jnp.broadcast_to(ppr.astype(ew), (E, d)) if attention in (0, 1) else None

        def routing_iter(u, apply_norm):
            u_row = mm(R, u)                                          # u[row_idx]       (E, d)
            # Per-capsule dot replicated over d:  (u[row] * x[col]) @ GGt.
            p = mm(u_row.astype(ew) * x_col, GGt).astype(ew)          # (E, d)
            if attention == 0:
                p = seg_softmax(p * ppr_b, stabilize=True)
            elif attention == 1:
                p = seg_softmax(p, stabilize=True)
                p = beta * p + (1.0 - beta) * ppr_b                   # bounded, non-negative
                p = seg_softmax(p, stabilize=False)
            else:
                p = seg_softmax(p, stabilize=True)
            u_new = mm_t(R, x_col * p)                                # scatter-sum      (N, d)
            if apply_norm:
                u_new = caps_norm(u_new)
            return u_new                                              # f32 (N, d)

        # fori_loop (not an unrolled Python loop) bounds per-iteration live ranges; the last
        # iteration is peeled because it skips the inter-iteration capsule normalize.
        u = u0
        if max_iter > 0:
            if max_iter > 1:
                u = lax.fori_loop(0, max_iter - 1,
                                  lambda _, uu: routing_iter(uu, apply_norm=is_xNorm), u)
            u = routing_iter(u, apply_norm=False)

        out_ref[...] = u.astype(out_ref.dtype)

    return kernel


def _device_kind():
    try:
        return jax.devices()[0].device_kind.lower()
    except Exception:
        return ""


def _vmem_capacity_bytes():
    try:
        return int(pltpu.get_tpu_info().vmem_capacity_bytes)
    except Exception:
        kind = _device_kind()
        # v7x: 64 MiB per TensorCore; earlier generations: 128 MiB.
        return 64 * 1024 * 1024 if ("v7" in kind or "tpu7" in kind) else 128 * 1024 * 1024


def _elementwise_dtype():
    # v6e / v7x have a bf16 VPU/EUP path; v5e (and older) do not -> keep f32 there.
    kind = _device_kind()
    if any(t in kind for t in ("v6", "v7", "tpu7")):
        return jnp.bfloat16
    return jnp.float32


@functools.partial(jax.jit, static_argnames=(
    "dim", "num_caps", "init_mtd", "attention", "beta", "is_xNorm", "max_iter"))
def routing_layer_pallas(x_nb, ppr, row_idx, col_idx, x_idx, *,
                         dim, num_caps, init_mtd, attention, beta, is_xNorm, max_iter):
    """Wrapper: index glue (plain gathers, degrees, GGt) + a single pallas_call."""
    M, d = x_nb.shape
    assert d == dim and dim % num_caps == 0
    E = int(row_idx.shape[0])
    N = int(x_idx.shape[0])
    delta_d = dim // num_caps

    x_nb = x_nb.astype(jnp.float32)
    row_i32 = row_idx.astype(jnp.int32)

    # ---- index glue outside the kernel: O(E*d)/O(N*d) row gathers + tiny per-node degrees ----
    inputs = [row_i32.reshape(E, 1),                        # row     (E, 1) int32 (R built in-kernel)
              x_nb[col_idx]]                                # x_col   (E, d) f32
    if init_mtd == 0:
        inputs.append(x_nb[x_idx])                          # x_init  (N, d) f32
    inputs.append(ppr.reshape(E, 1).astype(jnp.float32))    # ppr     (E, 1) f32
    deg = jax.ops.segment_sum(jnp.ones((E,), jnp.float32), row_i32, N)
    inputs.append((1.0 / jnp.maximum(deg, 1.0)).reshape(N, 1))          # inv_deg (N, 1) f32
    caps_of = jnp.arange(d) // delta_d                      # block-diag capsule indicator GGt
    inputs.append((caps_of[:, None] == caps_of[None, :]).astype(jnp.bfloat16))  # (d, d) bf16

    # ---- generation-aware VMEM budget for the single-shot (everything resident) kernel ----
    vmem_cap = _vmem_capacity_bytes()
    vmem_budget = min(int(vmem_cap * 0.85), vmem_cap - 8 * 1024 * 1024)  # headroom for temps/spill
    est = (E * N * 2                   # R (bf16), built in-kernel but VMEM-resident
           + 10 * E * d * 4            # x_col / u_row / p / e / den / ppr_b temporaries (f32 bound)
           + 2 * E * 128 * 4           # ppr + row_idx, lane-padded
           + 6 * N * d * 4             # u carry / per-segment sums
           + N * 128 * 4               # inv_deg, lane-padded
           + d * d * 2)                # GGt
    if est > vmem_budget:
        raise ValueError(
            f"RoutingLayer problem (E={E}, N={N}, d={d}) needs ~{est / 2**20:.1f} MiB VMEM "
            f"(budget {vmem_budget / 2**20:.1f} MiB on this chip); it requires the edge-tiled "
            "multi-pass variant. TODO(synk): edge-tiled grid (with a 'parallel' axis for the "
            "two v7x TensorCores) not implemented.")
    vmem_limit = int(min(max(2 * est, 32 * 1024 * 1024), vmem_budget))

    # ---- advisory cost estimate so XLA can schedule the gathers around this long call ----
    mm_r_per_iter = 8 if attention == 1 else 6              # (E,N,d)-sized MXU passes / iteration
    n_soft = 2 if attention == 1 else 1
    cost = pl.CostEstimate(
        flops=2 * E * N * d * (mm_r_per_iter * max_iter + (0 if init_mtd == 0 else 1))
              + 2 * E * d * d * (max_iter + 2),
        transcendentals=(n_soft + 2) * E * d * max_iter,
        bytes_accessed=(E * d + N * d * (2 if init_mtd == 0 else 1) + 2 * E + N) * 4 + d * d * 2)

    kernel = make_routing_kernel(init_mtd, attention, beta, is_xNorm, max_iter,
                                 _elementwise_dtype())
    vmem = pl.BlockSpec(memory_space=pltpu.MemorySpace.VMEM)

    out = pl.pallas_call(
        kernel,
        out_shape=jax.ShapeDtypeStruct((N, d), jnp.float32),
        in_specs=[vmem] * len(inputs),
        out_specs=vmem,
        compiler_params=pltpu.CompilerParams(vmem_limit_bytes=vmem_limit),
        cost_estimate=cost,
    )(*inputs)
    return out


# ------------------------- pure-JAX reference (mirrors the torch forward) ----------------------
def routing_layer_ref(x_nb, ppr, row_idx, col_idx, x_idx, *,
                      dim, num_caps, init_mtd, attention, beta, is_xNorm, max_iter):
    d, k = dim, num_caps
    delta_d = d // k
    N = int(x_idx.shape[0])

    if is_xNorm:
        xv = x_nb.reshape(-1, k, delta_d)
        nrm = jnp.sqrt(jnp.sum(xv * xv, axis=2, keepdims=True))
        x_nb = (xv / jnp.maximum(nrm, _EPS)).reshape(-1, d)

    xc = x_nb[col_idx]
    if init_mtd == 0:
        u = x_nb[x_idx]
    elif init_mtd == 1:
        u = jax.ops.segment_sum(xc, row_idx, N)
    else:
        u = jax.ops.segment_sum(xc * ppr[:, None], row_idx, N)

    def seg_softmax(v):  # v: (E,)
        m = jax.ops.segment_max(v, row_idx, N)
        e = jnp.exp(v - m[row_idx])
        s = jax.ops.segment_sum(e, row_idx, N)
        return e / s[row_idx]

    for it in range(max_iter):
        p = (u[row_idx] * xc).reshape(-1, k, delta_d).sum(2)  # (E, k)
        if attention == 0:
            p = p * ppr[:, None]
        elif attention == 1:
            p = jnp.stack([seg_softmax(p[:, i]) for i in range(k)], axis=1)
            p = beta * p + (1.0 - beta) * ppr[:, None]
        p = jnp.stack([seg_softmax(p[:, i]) for i in range(k)], axis=1)
        u = jax.ops.segment_sum(xc.reshape(-1, k, delta_d) * p[:, :, None], row_idx, N)
        if it < max_iter - 1 and is_xNorm:
            nrm = jnp.sqrt(jnp.sum(u * u, axis=2, keepdims=True))
            u = u / jnp.maximum(nrm, _EPS)
        u = u.reshape(-1, d)
    return u.reshape(-1, d)


if __name__ == "__main__":
    # RoutingLayer hyper-parameters (no learnable weights in __init__).
    dim, num_caps = 32, 4

    # Small synthetic graph: N target nodes, M neighbor feature rows, E edges.
    N, M, E = 8, 16, 32
    key = jax.random.PRNGKey(0)
    k1, k2, k3, k4 = jax.random.split(key, 4)
    x_nb = jax.random.normal(k1, (M, dim), dtype=jnp.float32)
    ppr = jax.random.uniform(k2, (E,), dtype=jnp.float32, minval=0.05, maxval=1.0)
    row_idx = jnp.repeat(jnp.arange(N, dtype=jnp.int32), E // N)          # 4 edges per node
    col_idx = jax.random.randint(k3, (E,), 0, M, dtype=jnp.int32)
    x_idx = jax.random.randint(k4, (N,), 0, M, dtype=jnp.int32)

    cases = [
        (dict(dim=dim, num_caps=num_caps, init_mtd=2, attention=1, beta=0.5,
              is_xNorm=True, max_iter=3), x_nb),
        # Unnormalized-feature path (init from x_idx, ppr-weighted attention).  Feature scale is
        # kept moderate so bf16 rounding of the raw dot-product logits stays well inside the
        # comparison tolerance.
        (dict(dim=dim, num_caps=num_caps, init_mtd=0, attention=0, beta=0.5,
              is_xNorm=False, max_iter=2), 0.5 * x_nb),
    ]

    for cfg, feats in cases:
        out = jax.block_until_ready(
            routing_layer_pallas(feats, ppr, row_idx, col_idx, x_idx, **cfg))
        ref = jax.block_until_ready(
            routing_layer_ref(feats, ppr, row_idx, col_idx, x_idx, **cfg))
        assert out.shape == (N, dim)
        # Matmul operands are bf16 (f32 accumulation) and, on v6e/v7x, the bulk elementwise
        # stage runs in bf16, so compare looser than pure-f32.
        np.testing.assert_allclose(np.asarray(out), np.asarray(ref), atol=5e-2, rtol=5e-2)

    print("KERNEL_OK")
</pallas_src>

<mosaic_0001>
module attributes {stable_mosaic.version = 11 : i64} {
  func.func @kernel(%arg0: memref<32x1xi32, #tpu.memory_space<vmem>>, %arg1: memref<32x32xf32, #tpu.memory_space<vmem>>, %arg2: memref<32x1xf32, #tpu.memory_space<vmem>>, %arg3: memref<8x1xf32, #tpu.memory_space<vmem>>, %arg4: memref<32x32xbf16, #tpu.memory_space<vmem>>, %arg5: memref<8x32xf32, #tpu.memory_space<vmem>>) attributes {dimension_semantics = [], scalar_prefetch = 0 : i64, scratch_operands = 0 : i64, tpu.core_type = #tpu.core_type<tc>} {
    %c0 = arith.constant 0 : index
    %c0_0 = arith.constant 0 : index
    %0 = vector.load %arg0[%c0, %c0_0] : memref<32x1xi32, #tpu.memory_space<vmem>>, vector<32x1xi32>
    %1 = tpu.iota {dimensions = array<i32: 1>} : vector<32x8xi32>
    %2 = vector.broadcast %0 : vector<32x1xi32> to vector<32x8xi32>
    %3 = arith.cmpi eq, %1, %2 : vector<32x8xi32>
    %4 = arith.extui %3 : vector<32x8xi1> to vector<32x8xi32>
    %5 = arith.sitofp %4 : vector<32x8xi32> to vector<32x8xf32>
    %6 = arith.truncf %5 : vector<32x8xf32> to vector<32x8xbf16>
    %c0_1 = arith.constant 0 : index
    %c0_2 = arith.constant 0 : index
    %7 = vector.load %arg4[%c0_1, %c0_2] : memref<32x32xbf16, #tpu.memory_space<vmem>>, vector<32x32xbf16>
    %c0_3 = arith.constant 0 : index
    %c0_4 = arith.constant 0 : index
    %8 = vector.load %arg3[%c0_3, %c0_4] : memref<8x1xf32, #tpu.memory_space<vmem>>, vector<8x1xf32>
    %c0_5 = arith.constant 0 : index
    %c0_6 = arith.constant 0 : index
    %9 = vector.load %arg1[%c0_5, %c0_6] : memref<32x32xf32, #tpu.memory_space<vmem>>, vector<32x32xf32>
    %10 = arith.mulf %9, %9 : vector<32x32xf32>
    %11 = arith.truncf %10 : vector<32x32xf32> to vector<32x32xbf16>
    %cst = arith.constant dense<0.000000e+00> : vector<32x32xf32>
    %12 = tpu.matmul %11, %7, %cst {dimension_numbers = #tpu.dot_dimension_numbers<[1], [0], [0], [1], [0, 0, 1, 1], [], []>} : vector<32x32xbf16>, vector<32x32xbf16>, vector<32x32xf32> -> vector<32x32xf32>
    %cst_7 = arith.constant 1.000000e-24 : f32
    %13 = vector.broadcast %cst_7 : f32 to vector<32x32xf32>
    %14 = arith.maximumf %12, %13 : vector<32x32xf32>
    %15 = math.rsqrt %14 : vector<32x32xf32>
    %16 = arith.mulf %9, %15 : vector<32x32xf32>
    %c0_8 = arith.constant 0 : index
    %c0_9 = arith.constant 0 : index
    %17 = vector.load %arg2[%c0_8, %c0_9] : memref<32x1xf32, #tpu.memory_space<vmem>>, vector<32x1xf32>
    %18 = vector.broadcast %17 : vector<32x1xf32> to vector<32x32xf32>
    %19 = arith.mulf %16, %18 : vector<32x32xf32>
    %20 = arith.truncf %19 : vector<32x32xf32> to vector<32x32xbf16>
    %cst_10 = arith.constant dense<0.000000e+00> : vector<8x32xf32>
    %21 = tpu.matmul %6, %20, %cst_10 {dimension_numbers = #tpu.dot_dimension_numbers<[0], [0], [1], [1], [0, 1, 1, 1], [], []>} : vector<32x8xbf16>, vector<32x32xbf16>, vector<8x32xf32> -> vector<8x32xf32>
    %22 = vector.shape_cast %17 : vector<32x1xf32> to vector<32x1xf32>
    %23 = vector.broadcast %22 : vector<32x1xf32> to vector<32x32xf32>
    %c0_i32 = arith.constant 0 : i32
    %c2_i32 = arith.constant 2 : i32
    %24 = arith.addi %c0_i32, %c2_i32 : i32
    %c1_i32 = arith.constant 1 : i32
    %25 = scf.for %arg6 = %c0_i32 to %24 step %c1_i32 iter_args(%arg7 = %21) -> (vector<8x32xf32>)  : i32 {
      %65 = arith.truncf %arg7 : vector<8x32xf32> to vector<8x32xbf16>
      %cst_26 = arith.constant dense<0.000000e+00> : vector<32x32xf32>
      %66 = tpu.matmul %6, %65, %cst_26 {dimension_numbers = #tpu.dot_dimension_numbers<[1], [0], [0], [1], [0, 0, 1, 1], [], []>} : vector<32x8xbf16>, vector<8x32xbf16>, vector<32x32xf32> -> vector<32x32xf32>
      %67 = arith.mulf %66, %16 : vector<32x32xf32>
      %68 = arith.truncf %67 : vector<32x32xf32> to vector<32x32xbf16>
      %cst_27 = arith.constant dense<0.000000e+00> : vector<32x32xf32>
      %69 = tpu.matmul %68, %7, %cst_27 {dimension_numbers = #tpu.dot_dimension_numbers<[1], [0], [0], [1], [0, 0, 1, 1], [], []>} : vector<32x32xbf16>, vector<32x32xbf16>, vector<32x32xf32> -> vector<32x32xf32>
      %70 = arith.truncf %69 : vector<32x32xf32> to vector<32x32xbf16>
      %cst_28 = arith.constant dense<0.000000e+00> : vector<8x32xf32>
      %71 = tpu.matmul %6, %70, %cst_28 {dimension_numbers = #tpu.dot_dimension_numbers<[0], [0], [1], [1], [0, 1, 1, 1], [], []>} : vector<32x8xbf16>, vector<32x32xbf16>, vector<8x32xf32> -> vector<8x32xf32>
      %72 = vector.broadcast %8 : vector<8x1xf32> to vector<8x32xf32>
      %73 = arith.mulf %71, %72 : vector<8x32xf32>
      %74 = arith.truncf %73 : vector<8x32xf32> to vector<8x32xbf16>
      %cst_29 = arith.constant dense<0.000000e+00> : vector<32x32xf32>
      %75 = tpu.matmul %6, %74, %cst_29 {dimension_numbers = #tpu.dot_dimension_numbers<[1], [0], [0], [1], [0, 0, 1, 1], [], []>} : vector<32x8xbf16>, vector<8x32xbf16>, vector<32x32xf32> -> vector<32x32xf32>
      %76 = arith.subf %69, %75 : vector<32x32xf32>
      %77 = math.exp %76 : vector<32x32xf32>
      %78 = arith.truncf %77 : vector<32x32xf32> to vector<32x32xbf16>
      %cst_30 = arith.constant dense<0.000000e+00> : vector<8x32xf32>
      %79 = tpu.matmul %6, %78, %cst_30 {dimension_numbers = #tpu.dot_dimension_numbers<[0], [0], [1], [1], [0, 1, 1, 1], [], []>} : vector<32x8xbf16>, vector<32x32xbf16>, vector<8x32xf32> -> vector<8x32xf32>
      %80 = arith.truncf %79 : vector<8x32xf32> to vector<8x32xbf16>
      %cst_31 = arith.constant dense<0.000000e+00> : vector<32x32xf32>
      %81 = tpu.matmul %6, %80, %cst_31 {dimension_numbers = #tpu.dot_dimension_numbers<[1], [0], [0], [1], [0, 0, 1, 1], [], []>} : vector<32x8xbf16>, vector<8x32xbf16>, vector<32x32xf32> -> vector<32x32xf32>
      %cst_32 = arith.constant 1.000000e-30 : f32
      %82 = vector.broadcast %cst_32 : f32 to vector<32x32xf32>
      %83 = arith.maximumf %81, %82 : vector<32x32xf32>
      %84 = tpu.reciprocal %83 {approx = true} : vector<32x32xf32> -> vector<32x32xf32>
      %85 = arith.mulf %77, %84 : vector<32x32xf32>
      %cst_33 = arith.constant 5.000000e-01 : f32
      %86 = vector.broadcast %cst_33 : f32 to vector<32x32xf32>
      %87 = arith.mulf %86, %85 : vector<32x32xf32>
      %cst_34 = arith.constant 5.000000e-01 : f32
      %88 = vector.broadcast %cst_34 : f32 to vector<32x32xf32>
      %89 = arith.mulf %88, %23 : vector<32x32xf32>
      %90 = arith.addf %87, %89 : vector<32x32xf32>
      %91 = math.exp %90 : vector<32x32xf32>
      %92 = arith.truncf %91 : vector<32x32xf32> to vector<32x32xbf16>
      %cst_35 = arith.constant dense<0.000000e+00> : vector<8x32xf32>
      %93 = tpu.matmul %6, %92, %cst_35 {dimension_numbers = #tpu.dot_dimension_numbers<[0], [0], [1], [1], [0, 1, 1, 1], [], []>} : vector<32x8xbf16>, vector<32x32xbf16>, vector<8x32xf32> -> vector<8x32xf32>
      %94 = arith.truncf %93 : vector<8x32xf32> to vector<8x32xbf16>
      %cst_36 = arith.constant dense<0.000000e+00> : vector<32x32xf32>
      %95 = tpu.matmul %6, %94, %cst_36 {dimension_numbers = #tpu.dot_dimension_numbers<[1], [0], [0], [1], [0, 0, 1, 1], [], []>} : vector<32x8xbf16>, vector<8x32xbf16>, vector<32x32xf32> -> vector<32x32xf32>
      %cst_37 = arith.constant 1.000000e-30 : f32
      %96 = vector.broadcast %cst_37 : f32 to vector<32x32xf32>
      %97 = arith.maximumf %95, %96 : vector<32x32xf32>
      %98 = tpu.reciprocal %97 {approx = true} : vector<32x32xf32> -> vector<32x32xf32>
      %99 = arith.mulf %91, %98 : vector<32x32xf32>
      %100 = arith.mulf %16, %99 : vector<32x32xf32>
      %101 = arith.truncf %100 : vector<32x32xf32> to vector<32x32xbf16>
      %cst_38 = arith.constant dense<0.000000e+00> : vector<8x32xf32>
      %102 = tpu.matmul %6, %101, %cst_38 {dimension_numbers = #tpu.dot_dimension_numbers<[0], [0], [1], [1], [0, 1, 1, 1], [], []>} : vector<32x8xbf16>, vector<32x32xbf16>, vector<8x32xf32> -> vector<8x32xf32>
      %103 = arith.mulf %102, %102 : vector<8x32xf32>
      %104 = arith.truncf %103 : vector<8x32xf32> to vector<8x32xbf16>
      %cst_39 = arith.constant dense<0.000000e+00> : vector<8x32xf32>
      %105 = tpu.matmul %104, %7, %cst_39 {dimension_numbers = #tpu.dot_dimension_numbers<[1], [0], [0], [1], [0, 0, 1, 1], [], []>} : vector<8x32xbf16>, vector<32x32xbf16>, vector<8x32xf32> -> vector<8x32xf32>
      %cst_40 = arith.constant 1.000000e-24 : f32
      %106 = vector.broadcast %cst_40 : f32 to vector<8x32xf32>
      %107 = arith.maximumf %105, %106 : vector<8x32xf32>
      %108 = math.rsqrt %107 : vector<8x32xf32>
      %109 = arith.mulf %102, %108 : vector<8x32xf32>
      scf.yield %109 : vector<8x32xf32>
    }
    %26 = arith.truncf %25 : vector<8x32xf32> to vector<8x32xbf16>
    %cst_11 = arith.constant dense<0.000000e+00> : vector<32x32xf32>
    %27 = tpu.matmul %6, %26, %cst_11 {dimension_numbers = #tpu.dot_dimension_numbers<[1], [0], [0], [1], [0, 0, 1, 1], [], []>} : vector<32x8xbf16>, vector<8x32xbf16>, vector<32x32xf32> -> vector<32x32xf32>
    %28 = arith.mulf %27, %16 : vector<32x32xf32>
    %29 = arith.truncf %28 : vector<32x32xf32> to vector<32x32xbf16>
    %cst_12 = arith.constant dense<0.000000e+00> : vector<32x32xf32>
    %30 = tpu.matmul %29, %7, %cst_12 {dimension_numbers = #tpu.dot_dimension_numbers<[1], [0], [0], [1], [0, 0, 1, 1], [], []>} : vector<32x32xbf16>, vector<32x32xbf16>, vector<32x32xf32> -> vector<32x32xf32>
    %31 = arith.truncf %30 : vector<32x32xf32> to vector<32x32xbf16>
    %cst_13 = arith.constant dense<0.000000e+00> : vector<8x32xf32>
    %32 = tpu.matmul %6, %31, %cst_13 {dimension_numbers = #tpu.dot_dimension_numbers<[0], [0], [1], [1], [0, 1, 1, 1], [], []>} : vector<32x8xbf16>, vector<32x32xbf16>, vector<8x32xf32> -> vector<8x32xf32>
    %33 = vector.broadcast %8 : vector<8x1xf32> to vector<8x32xf32>
    %34 = arith.mulf %32, %33 : vector<8x32xf32>
    %35 = arith.truncf %34 : vector<8x32xf32> to vector<8x32xbf16>
    %cst_14 = arith.constant dense<0.000000e+00> : vector<32x32xf32>
    %36 = tpu.matmul %6, %35, %cst_14 {dimension_numbers = #tpu.dot_dimension_numbers<[1], [0], [0], [1], [0, 0, 1, 1], [], []>} : vector<32x8xbf16>, vector<8x32xbf16>, vector<32x32xf32> -> vector<32x32xf32>
    %37 = arith.subf %30, %36 : vector<32x32xf32>
    %38 = math.exp %37 : vector<32x32xf32>
    %39 = arith.truncf %38 : vector<32x32xf32> to vector<32x32xbf16>
    %cst_15 = arith.constant dense<0.000000e+00> : vector<8x32xf32>
    %40 = tpu.matmul %6, %39, %cst_15 {dimension_numbers = #tpu.dot_dimension_numbers<[0], [0], [1], [1], [0, 1, 1, 1], [], []>} : vector<32x8xbf16>, vector<32x32xbf16>, vector<8x32xf32> -> vector<8x32xf32>
    %41 = arith.truncf %40 : vector<8x32xf32> to vector<8x32xbf16>
    %cst_16 = arith.constant dense<0.000000e+00> : vector<32x32xf32>
    %42 = tpu.matmul %6, %41, %cst_16 {dimension_numbers = #tpu.dot_dimension_numbers<[1], [0], [0], [1], [0, 0, 1, 1], [], []>} : vector<32x8xbf16>, vector<8x32xbf16>, vector<32x32xf32> -> vector<32x32xf32>
    %cst_17 = arith.constant 1.000000e-30 : f32
    %43 = vector.broadcast %cst_17 : f32 to vector<32x32xf32>
    %44 = arith.maximumf %42, %43 : vector<32x32xf32>
    %45 = tpu.reciprocal %44 {approx = true} : vector<32x32xf32> -> vector<32x32xf32>
    %46 = arith.mulf %38, %45 : vector<32x32xf32>
    %cst_18 = arith.constant 5.000000e-01 : f32
    %47 = vector.broadcast %cst_18 : f32 to vector<32x32xf32>
    %48 = arith.mulf %47, %46 : vector<32x32xf32>
    %cst_19 = arith.constant 5.000000e-01 : f32
    %49 = vector.broadcast %cst_19 : f32 to vector<32x32xf32>
    %50 = arith.mulf %49, %23 : vector<32x32xf32>
    %51 = arith.addf %48, %50 : vector<32x32xf32>
    %52 = math.exp %51 : vector<32x32xf32>
    %53 = arith.truncf %52 : vector<32x32xf32> to vector<32x32xbf16>
    %cst_20 = arith.constant dense<0.000000e+00> : vector<8x32xf32>
    %54 = tpu.matmul %6, %53, %cst_20 {dimension_numbers = #tpu.dot_dimension_numbers<[0], [0], [1], [1], [0, 1, 1, 1], [], []>} : vector<32x8xbf16>, vector<32x32xbf16>, vector<8x32xf32> -> vector<8x32xf32>
    %55 = arith.truncf %54 : vector<8x32xf32> to vector<8x32xbf16>
    %cst_21 = arith.constant dense<0.000000e+00> : vector<32x32xf32>
    %56 = tpu.matmul %6, %55, %cst_21 {dimension_numbers = #tpu.dot_dimension_numbers<[1], [0], [0], [1], [0, 0, 1, 1], [], []>} : vector<32x8xbf16>, vector<8x32xbf16>, vector<32x32xf32> -> vector<32x32xf32>
    %cst_22 = arith.constant 1.000000e-30 : f32
    %57 = vector.broadcast %cst_22 : f32 to vector<32x32xf32>
    %58 = arith.maximumf %56, %57 : vector<32x32xf32>
    %59 = tpu.reciprocal %58 {approx = true} : vector<32x32xf32> -> vector<32x32xf32>
    %60 = arith.mulf %52, %59 : vector<32x32xf32>
    %61 = arith.mulf %16, %60 : vector<32x32xf32>
    %62 = arith.truncf %61 : vector<32x32xf32> to vector<32x32xbf16>
    %cst_23 = arith.constant dense<0.000000e+00> : vector<8x32xf32>
    %63 = tpu.matmul %6, %62, %cst_23 {dimension_numbers = #tpu.dot_dimension_numbers<[0], [0], [1], [1], [0, 1, 1, 1], [], []>} : vector<32x8xbf16>, vector<32x32xbf16>, vector<8x32xf32> -> vector<8x32xf32>
    %c0_24 = arith.constant 0 : index
    %c0_25 = arith.constant 0 : index
    %64 = vector.load %arg5[%c0_24, %c0_25] : memref<8x32xf32, #tpu.memory_space<vmem>>, vector<8x32xf32>
    tpu.vector_store %arg5[%c0_24, %c0_25], %63 {strides = array<i32>} : memref<8x32xf32, #tpu.memory_space<vmem>>, vector<8x32xf32>,
    return
  }
}

</mosaic_0001>

<llo_original>
// kernel: routing_layer_pallas.1
$region0: #{routing_layer_pallas.1}
  #allocation0 [shape = 'u32[]', space=smem, size = 0x4, offset = 0x4, fixed_abs, tag = 'smem constant byte address 0x4 - core index']
  #allocation1 [shape = 'u32[72,128]{1,0:T(1,128)}', space=vmem, size = 0x9000, scoped, tag = 'internal scratch']
  %s0 = inlined_call_operand.vmem [shape: s32[32,1], index: 0, kind: input, shape index: {}]
  %s1 = inlined_call_operand.vmem [shape: f32[32,32], index: 1, kind: input, shape index: {}]
  %s2 = inlined_call_operand.vmem [shape: f32[32,1], index: 2, kind: input, shape index: {}]
  %s3 = inlined_call_operand.vmem [shape: f32[8,1], index: 3, kind: input, shape index: {}]
  %s4 = inlined_call_operand.vmem [shape: bf16[32,32], index: 4, kind: input, shape index: {}]
  %s5 = inlined_call_operand.hbm [shape: f32[8,32], index: 5, kind: output, shape index: {}]
  %s6 = sld [smem:[#allocation0]]
  $region37: #{routing_layer_pallas.1} parent=0
    _
  %s8 = ssub.s32 1, %s6
  %s9 = scalar_select 0, %s8, %s6
  $region1: #{routing_layer_pallas.1} parent=0
    #allocation2 [shape = 'u8[4096]{0}', space=vmem, size = 0x1000, scoped, tag = 'output window, operand 0, single buffered']
    #allocation3 [shape = 's32[1]{0}', space=sflag, size = 0x4, scoped, tag = 'scoped memory for routing_layer_pallas.1']
    %10 = vsyncpa [#allocation3], 0
    // Predicated region
    $region2: #{routing_layer_pallas.1} parent=1 // pred_check
      _
    $region3: #{routing_layer_pallas.1} parent=1 // pred_check_branch
      %12 = sbr.rel (0) target = $region5
    $region4: #{routing_layer_pallas.1} parent=1 // pred_region
      _
    $region5: #{routing_layer_pallas.1} parent=1 // pred_fallthru
      _
    // Predicated region
    $region6: #{routing_layer_pallas.1} parent=1 // pred_check
      _
    $region7: #{routing_layer_pallas.1} parent=1 // pred_check_branch
      %14 = sbr.rel (0) target = $region9
    $region8: #{routing_layer_pallas.1} parent=1 // pred_region
      _
    $region9: #{routing_layer_pallas.1} parent=1 // pred_fallthru
      _
    // Predicated region
    $region10: #{routing_layer_pallas.1} parent=1 // pred_check
      _
    $region11: #{routing_layer_pallas.1} parent=1 // pred_check_branch
      %16 = sbr.rel (0) target = $region13
    $region12: #{routing_layer_pallas.1} parent=1 // pred_region
      _
    $region13: #{routing_layer_pallas.1} parent=1 // pred_fallthru
      _
    // Predicated region
    $region14: #{routing_layer_pallas.1} parent=1 // pred_check
      _
    $region15: #{routing_layer_pallas.1} parent=1 // pred_check_branch
      %18 = sbr.rel (0) target = $region17
    $region16: #{routing_layer_pallas.1} parent=1 // pred_region
      _
    $region17: #{routing_layer_pallas.1} parent=1 // pred_fallthru
      _
    // Predicated region
    $region18: #{routing_layer_pallas.1} parent=1 // pred_check
      _
    $region19: #{routing_layer_pallas.1} parent=1 // pred_check_branch
      %20 = sbr.rel (0) target = $region21
    $region20: #{routing_layer_pallas.1} parent=1 // pred_region
      _
    $region21: #{routing_layer_pallas.1} parent=1 // pred_fallthru
      _
    %v22 = vld [vmem:[%s0] sm:$0xff]
    %v23 = vld [vmem:[%s0 + $0x8] sm:$0xff]
    %v24 = vld [vmem:[%s0 + $0x10] sm:$0xff]
    %v25 = vld [vmem:[%s0 + $0x18] sm:$0xff]
    %v26 = vlaneseq
    %v27 = vand.u32 %v26, 127
    %28 = vset.pattern.permute.xlu0 0
    %29 = vperm.xlu0 %28, %v22
    %v30 = vpop.permute.xlu0 %29
    %31 = vset.pattern.permute.xlu0 0
    %32 = vperm.xlu0 %31, %v23
    %v33 = vpop.permute.xlu0 %32
    %34 = vset.pattern.permute.xlu0 0
    %35 = vperm.xlu0 %34, %v24
    %v36 = vpop.permute.xlu0 %35
    %37 = vset.pattern.permute.xlu0 0
    %38 = vperm.xlu0 %37, %v25
    %v39 = vpop.permute.xlu0 %38
    %vm40 = vcmp.eq.s32.totalorder %v27, %v30
    %vm41 = vcmp.eq.s32.totalorder %v27, %v33
    %vm42 = vcmp.eq.s32.totalorder %v27, %v36
    %vm43 = vcmp.eq.s32.totalorder %v27, %v39
    %v44 = vsel %vm40, 1, 0
    %v45 = vsel %vm41, 1, 0
    %v46 = vsel %vm42, 1, 0
    %v47 = vsel %vm43, 1, 0
    %v48 = vcvt.s32.f32 %v44
    %v49 = vcvt.s32.f32 %v45
    %v50 = vcvt.s32.f32 %v46
    %v51 = vcvt.s32.f32 %v47
    %v52 = vpack.c.bf16 %v49, %v48
    %v53 = vpack.c.bf16 %v51, %v50
    %v54 = vld [vmem:[%s4] sm:$0xf]
    %v55 = vld [vmem:[%s4 + $0x4] sm:$0xf]
    %v56 = vld [vmem:[%s4 + $0x8] sm:$0xf]
    %v57 = vld [vmem:[%s4 + $0xc] sm:$0xf]
    %v58 = vld [vmem:[%s3] sm:$0xff]
    %v59 = vld [vmem:[%s1] sm:$0xff]
    %v60 = vld [vmem:[%s1 + $0x8] sm:$0xff]
    %v61 = vld [vmem:[%s1 + $0x10] sm:$0xff]
    %v62 = vld [vmem:[%s1 + $0x18] sm:$0xff]
    %v63 = vmul.f32 %v59, %v59
    %v64 = vmul.f32 %v60, %v60
    %v65 = vmul.f32 %v61, %v61
    %v66 = vmul.f32 %v62, %v62
    %v67 = vpack.c.bf16 %v64, %v63
    %v68 = vpack.c.bf16 %v66, %v65
    %v73 = vunpack.c.l.b16 %v54
    %v74 = vunpack.c.l.b16 %v55
    %v75 = vunpack.c.l.b16 %v56
    %v76 = vunpack.c.l.b16 %v57
    %v77 = vpack.c.b16 %v74, %v73
    %v78 = vpack.c.b16 %v76, %v75
    %vm81 = vcmask 261120
    %v83 = vsel %vm81, %v67, 0
    %v86 = vsel %vm81, %v68, 0
    %88 = vmatpush.bf16.msra.mxu0 0
    %89 = vmatpush.bf16.msra.mxu0 0
    %90 = vmatpush.bf16.msra.mxu0 0
    %91 = vmatpush.bf16.msra.mxu0 0
    %92 = vmatpush.bf16.msra.mxu0 0
    %93 = vmatpush.bf16.msra.mxu0 0
    %94 = vmatpush.bf16.msra.mxu0 %v78
    %95 = vmatpush.bf16.msra.mxu0 %v77
    %96 = vmatmul.bf16.gmra.mxu0 %v83
    %v97 = vpop.f32.mrf.mxu0
    %v98 = vadd.f32 0.0, %v97
    %v99 = vpop.f32.mrf.mxu0
    %v100 = vadd.f32 0.0, %v99
    %101 = vmatmul.bf16.gmra.mxu0 %v86
    %v102 = vpop.f32.mrf.mxu0
    %v103 = vadd.f32 0.0, %v102
    %v104 = vpop.f32.mrf.mxu0
    %v105 = vadd.f32 0.0, %v104
    %106 = vdwg.mxu0
    %v107 = vmax.f32 %v98, 1e-24
    %v108 = vmax.f32 %v100, 1e-24
    %v109 = vmax.f32 %v103, 1e-24
    %v110 = vmax.f32 %v105, 1e-24
    %v111 = vrsqrt.pop %v107
    %v112 = vmul.f32 %v111, %v107
    %v113 = vmul.f32 %v112, %v111
    %v114 = vmul.f32 0.5, %v113
    %v115 = vsub.f32 1.5, %v114
    %v116 = vmul.f32 %v111, %v115
    %vm117 = vweird.f32 %v107
    %vm118 = vweird.f32 %v111
    %vm119 = vmor %vm117, %vm118
    %v120 = vsel %vm119, %v111, %v116
    %v121 = vrsqrt.pop %v108
    %v122 = vmul.f32 %v121, %v108
    %v123 = vmul.f32 %v122, %v121
    %v124 = vmul.f32 0.5, %v123
    %v125 = vsub.f32 1.5, %v124
    %v126 = vmul.f32 %v121, %v125
    %vm127 = vweird.f32 %v108
    %vm128 = vweird.f32 %v121
    %vm129 = vmor %vm127, %vm128
    %v130 = vsel %vm129, %v121, %v126
    %v131 = vrsqrt.pop %v109
    %v132 = vmul.f32 %v131, %v109
    %v133 = vmul.f32 %v132, %v131
    %v134 = vmul.f32 0.5, %v133
    %v135 = vsub.f32 1.5, %v134
    %v136 = vmul.f32 %v131, %v135
    %vm137 = vweird.f32 %v109
    %vm138 = vweird.f32 %v131
    %vm139 = vmor %vm137, %vm138
    %v140 = vsel %vm139, %v131, %v136
    %v141 = vrsqrt.pop %v110
    %v142 = vmul.f32 %v141, %v110
    %v143 = vmul.f32 %v142, %v141
    %v144 = vmul.f32 0.5, %v143
    %v145 = vsub.f32 1.5, %v144
    %v146 = vmul.f32 %v141, %v145
    %vm147 = vweird.f32 %v110
    %vm148 = vweird.f32 %v141
    %vm149 = vmor %vm147, %vm148
    %v150 = vsel %vm149, %v141, %v146
    %v151 = vmul.f32 %v59, %v120
    %v152 = vmul.f32 %v60, %v130
    %v153 = vmul.f32 %v61, %v140
    %v154 = vmul.f32 %v62, %v150
    %v155 = vld [vmem:[%s2] sm:$0xff]
    %v156 = vld [vmem:[%s2 + $0x8] sm:$0xff]
    %v157 = vld [vmem:[%s2 + $0x10] sm:$0xff]
    %v158 = vld [vmem:[%s2 + $0x18] sm:$0xff]
    %160 = vset.pattern.permute.xlu0 0
    %161 = vperm.xlu0 %160, %v155
    %v162 = vpop.permute.xlu0 %161
    %165 = vset.pattern.permute.xlu0 0
    %166 = vperm.xlu0 %165, %v156
    %v167 = vpop.permute.xlu0 %166
    %170 = vset.pattern.permute.xlu0 0
    %171 = vperm.xlu0 %170, %v157
    %v172 = vpop.permute.xlu0 %171
    %175 = vset.pattern.permute.xlu0 0
    %176 = vperm.xlu0 %175, %v158
    %v177 = vpop.permute.xlu0 %176
    %v179 = vmul.f32 %v151, %v162
    %v180 = vmul.f32 %v152, %v167
    %v181 = vmul.f32 %v153, %v172
    %v182 = vmul.f32 %v154, %v177
    %v183 = vpack.c.bf16 %v180, %v179
    %v184 = vpack.c.bf16 %v182, %v181
    %185 = vxpose.xlu0.c.b16.start [1/8] %v52, 128
    %186 = vxpose.xlu0.c.b16.cont [2/8] %v53, 128
    %187 = vxpose.xlu0.c.b16.cont [3/8] 0, 128
    %188 = vxpose.xlu0.c.b16.cont [4/8] 0, 128
    %189 = vxpose.xlu0.c.b16.cont [5/8] 0, 128
    %190 = vxpose.xlu0.c.b16.cont [6/8] 0, 128
    %191 = vxpose.xlu0.c.b16.cont [7/8] 0, 128
    %192 = vxpose.xlu0.c.b16.end [8/8] 0, 128
    %v193 = vpop.trf.xlu0
    %v194 = vpop.trf.xlu0
    %v195 = vpop.trf.xlu0
    %v196 = vpop.trf.xlu0
    %v197 = vpop.trf.xlu0
    %v198 = vpop.trf.xlu0
    %v199 = vpop.trf.xlu0
    %v200 = vpop.trf.xlu0
    %v202 = vsel %vm81, %v193, 0
    %204 = vmatpush.bf16.msra.mxu0 0
    %205 = vmatpush.bf16.msra.mxu0 0
    %206 = vmatpush.bf16.msra.mxu0 0
    %207 = vmatpush.bf16.msra.mxu0 0
    %208 = vmatpush.bf16.msra.mxu0 0
    %209 = vmatpush.bf16.msra.mxu0 0
    %210 = vmatpush.bf16.msra.mxu0 %v184
    %211 = vmatpush.bf16.msra.mxu0 %v183
    %212 = vmatmul.bf16.gmra.mxu0 %v202
    %v213 = vpop.f32.mrf.mxu0
    %v214 = vadd.f32 0.0, %v213
    %v215 = vpop.f32.mrf.mxu0
    %216 = vdwg.mxu0
    loop: start=0, step=1, limit=2
    $region22: #{routing_layer_pallas.1} parent=1 // loop_pre_header
      _
    $region23: #{routing_layer_pallas.1} parent=1 // loop_header
      %s218 = sphi 0, %s222
      %p219 = scmp.ge.s32.totalorder %s218, 2
      %v223 = vphi %v214, %v510
    $region24: #{routing_layer_pallas.1} parent=1 // loop_header_branch
      %221 = sbr.rel (%p219) target = $region28
    $region25: #{routing_layer_pallas.1} parent=1 // loop_body
      %v224 = vpack.c.bf16 %v223, %v223
      %vm225 = vcmask 64512
      %v227 = vsel %vm225, %v52, 0
      %v230 = vsel %vm225, %v53, 0
      %vm232 = vcmask 1043456
      %v234 = vsel %vm232, %v224, 0
      %236 = vmatpush.bf16.msra.mxu0 0
      %237 = vmatpush.bf16.msra.mxu0 0
      %238 = vmatpush.bf16.msra.mxu0 0
      %239 = vmatpush.bf16.msra.mxu0 0
      %240 = vmatpush.bf16.msra.mxu0 0
      %241 = vmatpush.bf16.msra.mxu0 0
      %242 = vmatpush.bf16.msra.mxu0 0
      %243 = vmatpush.bf16.msra.mxu0 %v234
      %244 = vmatmul.bf16.gmra.mxu0 %v227
      %v245 = vpop.f32.mrf.mxu0
      %v246 = vadd.f32 0.0, %v245
      %v247 = vpop.f32.mrf.mxu0
      %v248 = vadd.f32 0.0, %v247
      %249 = vmatmul.bf16.gmra.mxu0 %v230
      %v250 = vpop.f32.mrf.mxu0
      %v251 = vadd.f32 0.0, %v250
      %v252 = vpop.f32.mrf.mxu0
      %v253 = vadd.f32 0.0, %v252
      %254 = vdwg.mxu0
      %v255 = vmul.f32 %v246, %v151
      %v256 = vmul.f32 %v248, %v152
      %v257 = vmul.f32 %v251, %v153
      %v258 = vmul.f32 %v253, %v154
      %v259 = vpack.c.bf16 %v256, %v255
      %v260 = vpack.c.bf16 %v258, %v257
      %v262 = vsel %vm81, %v259, 0
      %v265 = vsel %vm81, %v260, 0
      %267 = vmatpush.bf16.msra.mxu0 0
      %268 = vmatpush.bf16.msra.mxu0 0
      %269 = vmatpush.bf16.msra.mxu0 0
      %270 = vmatpush.bf16.msra.mxu0 0
      %271 = vmatpush.bf16.msra.mxu0 0
      %272 = vmatpush.bf16.msra.mxu0 0
      %273 = vmatpush.bf16.msra.mxu0 %v78
      %274 = vmatpush.bf16.msra.mxu0 %v77
      %275 = vmatmul.bf16.gmra.mxu0 %v262
      %v276 = vpop.f32.mrf.mxu0
      %v277 = vadd.f32 0.0, %v276
      %v278 = vpop.f32.mrf.mxu0
      %v279 = vadd.f32 0.0, %v278
      %280 = vmatmul.bf16.gmra.mxu0 %v265
      %v281 = vpop.f32.mrf.mxu0
      %v282 = vadd.f32 0.0, %v281
      %v283 = vpop.f32.mrf.mxu0
      %v284 = vadd.f32 0.0, %v283
      %285 = vdwg.mxu0
      %v286 = vpack.c.bf16 %v279, %v277
      %v287 = vpack.c.bf16 %v284, %v282
      %288 = vmatpush.bf16.msra.mxu0 0
      %289 = vmatpush.bf16.msra.mxu0 0
      %290 = vmatpush.bf16.msra.mxu0 0
      %291 = vmatpush.bf16.msra.mxu0 0
      %292 = vmatpush.bf16.msra.mxu0 0
      %293 = vmatpush.bf16.msra.mxu0 0
      %294 = vmatpush.bf16.msra.mxu0 %v287
      %295 = vmatpush.bf16.msra.mxu0 %v286
      %296 = vmatmul.bf16.gmra.mxu0 %v202
      %v297 = vpop.f32.mrf.mxu0
      %v298 = vadd.f32 0.0, %v297
      %v299 = vpop.f32.mrf.mxu0
      %300 = vdwg.mxu0
      %302 = vset.pattern.permute.xlu0 0
      %303 = vperm.xlu0 %302, %v58
      %v304 = vpop.permute.xlu0 %303
      %v306 = vmul.f32 %v298, %v304
      %v307 = vpack.c.bf16 %v306, %v306
      %v309 = vsel %vm232, %v307, 0
      %311 = vmatpush.bf16.msra.mxu0 0
      %312 = vmatpush.bf16.msra.mxu0 0
      %313 = vmatpush.bf16.msra.mxu0 0
      %314 = vmatpush.bf16.msra.mxu0 0
      %315 = vmatpush.bf16.msra.mxu0 0
      %316 = vmatpush.bf16.msra.mxu0 0
      %317 = vmatpush.bf16.msra.mxu0 0
      %318 = vmatpush.bf16.msra.mxu0 %v309
      %319 = vmatmul.bf16.gmra.mxu0 %v227
      %v320 = vpop.f32.mrf.mxu0
      %v321 = vadd.f32 0.0, %v320
      %v322 = vpop.f32.mrf.mxu0
      %v323 = vadd.f32 0.0, %v322
      %324 = vmatmul.bf16.gmra.mxu0 %v230
      %v325 = vpop.f32.mrf.mxu0
      %v326 = vadd.f32 0.0, %v325
      %v327 = vpop.f32.mrf.mxu0
      %v328 = vadd.f32 0.0, %v327
      %329 = vdwg.mxu0
      %v330 = vsub.f32 %v277, %v321
      %v331 = vsub.f32 %v279, %v323
      %v332 = vsub.f32 %v282, %v326
      %v333 = vsub.f32 %v284, %v328
      %v334 = vmul.f32 %v330, 1.442695
      %v335 = vpow.pop %v334
      %v336 = vmul.f32 %v331, 1.442695
      %v337 = vpow.pop %v336
      %v338 = vmul.f32 %v332, 1.442695
      %v339 = vpow.pop %v338
      %v340 = vmul.f32 %v333, 1.442695
      %v341 = vpow.pop %v340
      %v342 = vpack.c.bf16 %v337, %v335
      %v343 = vpack.c.bf16 %v341, %v339
      %344 = vmatpush.bf16.msra.mxu0 0
      %345 = vmatpush.bf16.msra.mxu0 0
      %346 = vmatpush.bf16.msra.mxu0 0
      %347 = vmatpush.bf16.msra.mxu0 0
      %348 = vmatpush.bf16.msra.mxu0 0
      %349 = vmatpush.bf16.msra.mxu0 0
      %350 = vmatpush.bf16.msra.mxu0 %v343
      %351 = vmatpush.bf16.msra.mxu0 %v342
      %352 = vmatmul.bf16.gmra.mxu0 %v202
      %v353 = vpop.f32.mrf.mxu0
      %v354 = vadd.f32 0.0, %v353
      %v355 = vpop.f32.mrf.mxu0
      %356 = vdwg.mxu0
      %v357 = vpack.c.bf16 %v354, %v354
      %v359 = vsel %vm232, %v357, 0
      %361 = vmatpush.bf16.msra.mxu0 0
      %362 = vmatpush.bf16.msra.mxu0 0
      %363 = vmatpush.bf16.msra.mxu0 0
      %364 = vmatpush.bf16.msra.mxu0 0
      %365 = vmatpush.bf16.msra.mxu0 0
      %366 = vmatpush.bf16.msra.mxu0 0
      %367 = vmatpush.bf16.msra.mxu0 0
      %368 = vmatpush.bf16.msra.mxu0 %v359
      %369 = vmatmul.bf16.gmra.mxu0 %v227
      %v370 = vpop.f32.mrf.mxu0
      %v371 = vadd.f32 0.0, %v370
      %v372 = vpop.f32.mrf.mxu0
      %v373 = vadd.f32 0.0, %v372
      %374 = vmatmul.bf16.gmra.mxu0 %v230
      %v375 = vpop.f32.mrf.mxu0
      %v376 = vadd.f32 0.0, %v375
      %v377 = vpop.f32.mrf.mxu0
      %v378 = vadd.f32 0.0, %v377
      %379 = vdwg.mxu0
      %v380 = vmax.f32 %v371, 1e-30
      %v381 = vmax.f32 %v373, 1e-30
      %v382 = vmax.f32 %v376, 1e-30
      %v383 = vmax.f32 %v378, 1e-30
      %v384 = vrcp.pop %v380
      %v385 = vrcp.pop %v381
      %v386 = vrcp.pop %v382
      %v387 = vrcp.pop %v383
      %v388 = vmul.f32 %v335, %v384
      %v389 = vmul.f32 %v337, %v385
      %v390 = vmul.f32 %v339, %v386
      %v391 = vmul.f32 %v341, %v387
      %v392 = vmul.f32 %v388, 0.5
      %v393 = vmul.f32 %v389, 0.5
      %v394 = vmul.f32 %v390, 0.5
      %v395 = vmul.f32 %v391, 0.5
      %v396 = vmul.f32 %v162, 0.5
      %v397 = vmul.f32 %v167, 0.5
      %v398 = vmul.f32 %v172, 0.5
      %v399 = vmul.f32 %v177, 0.5
      %v400 = vadd.f32 %v392, %v396
      %v401 = vadd.f32 %v393, %v397
      %v402 = vadd.f32 %v394, %v398
      %v403 = vadd.f32 %v395, %v399
      %v404 = vmul.f32 %v400, 1.442695
      %v405 = vpow.pop %v404
      %v406 = vmul.f32 %v401, 1.442695
      %v407 = vpow.pop %v406
      %v408 = vmul.f32 %v402, 1.442695
      %v409 = vpow.pop %v408
      %v410 = vmul.f32 %v403, 1.442695
      %v411 = vpow.pop %v410
      %v412 = vpack.c.bf16 %v407, %v405
      %v413 = vpack.c.bf16 %v411, %v409
      %414 = vmatpush.bf16.msra.mxu0 0
      %415 = vmatpush.bf16.msra.mxu0 0
      %416 = vmatpush.bf16.msra.mxu0 0
      %417 = vmatpush.bf16.msra.mxu0 0
      %418 = vmatpush.bf16.msra.mxu0 0
      %419 = vmatpush.bf16.msra.mxu0 0
      %420 = vmatpush.bf16.msra.mxu0 %v413
      %421 = vmatpush.bf16.msra.mxu0 %v412
      %422 = vmatmul.bf16.gmra.mxu0 %v202
      %v423 = vpop.f32.mrf.mxu0
      %v424 = vadd.f32 0.0, %v423
      %v425 = vpop.f32.mrf.mxu0
      %426 = vdwg.mxu0
      %v427 = vpack.c.bf16 %v424, %v424
      %v429 = vsel %vm232, %v427, 0
      %431 = vmatpush.bf16.msra.mxu0 0
      %432 = vmatpush.bf16.msra.mxu0 0
      %433 = vmatpush.bf16.msra.mxu0 0
      %434 = vmatpush.bf16.msra.mxu0 0
      %435 = vmatpush.bf16.msra.mxu0 0
      %436 = vmatpush.bf16.msra.mxu0 0
      %437 = vmatpush.bf16.msra.mxu0 0
      %438 = vmatpush.bf16.msra.mxu0 %v429
      %439 = vmatmul.bf16.gmra.mxu0 %v227
      %v440 = vpop.f32.mrf.mxu0
      %v441 = vadd.f32 0.0, %v440
      %v442 = vpop.f32.mrf.mxu0
      %v443 = vadd.f32 0.0, %v442
      %444 = vmatmul.bf16.gmra.mxu0 %v230
      %v445 = vpop.f32.mrf.mxu0
      %v446 = vadd.f32 0.0, %v445
      %v447 = vpop.f32.mrf.mxu0
      %v448 = vadd.f32 0.0, %v447
      %449 = vdwg.mxu0
      %v450 = vmax.f32 %v441, 1e-30
      %v451 = vmax.f32 %v443, 1e-30
      %v452 = vmax.f32 %v446, 1e-30
      %v453 = vmax.f32 %v448, 1e-30
      %v454 = vrcp.pop %v450
      %v455 = vrcp.pop %v451
      %v456 = vrcp.pop %v452
      %v457 = vrcp.pop %v453
      %v458 = vmul.f32 %v405, %v454
      %v459 = vmul.f32 %v407, %v455
      %v460 = vmul.f32 %v409, %v456
      %v461 = vmul.f32 %v411, %v457
      %v462 = vmul.f32 %v151, %v458
      %v463 = vmul.f32 %v152, %v459
      %v464 = vmul.f32 %v153, %v460
      %v465 = vmul.f32 %v154, %v461
      %v466 = vpack.c.bf16 %v463, %v462
      %v467 = vpack.c.bf16 %v465, %v464
      %468 = vmatpush.bf16.msra.mxu0 0
      %469 = vmatpush.bf16.msra.mxu0 0
      %470 = vmatpush.bf16.msra.mxu0 0
      %471 = vmatpush.bf16.msra.mxu0 0
      %472 = vmatpush.bf16.msra.mxu0 0
      %473 = vmatpush.bf16.msra.mxu0 0
      %474 = vmatpush.bf16.msra.mxu0 %v467
      %475 = vmatpush.bf16.msra.mxu0 %v466
      %476 = vmatmul.bf16.gmra.mxu0 %v202
      %v477 = vpop.f32.mrf.mxu0
      %v478 = vadd.f32 0.0, %v477
      %v479 = vpop.f32.mrf.mxu0
      %480 = vdwg.mxu0
      %v481 = vmul.f32 %v478, %v478
      %v482 = vpack.c.bf16 %v481, %v481
      %v484 = vsel %vm81, %v482, 0
      %486 = vmatpush.bf16.msra.mxu0 0
      %487 = vmatpush.bf16.msra.mxu0 0
      %488 = vmatpush.bf16.msra.mxu0 0
      %489 = vmatpush.bf16.msra.mxu0 0
      %490 = vmatpush.bf16.msra.mxu0 0
      %491 = vmatpush.bf16.msra.mxu0 0
      %492 = vmatpush.bf16.msra.mxu0 %v78
      %493 = vmatpush.bf16.msra.mxu0 %v77
      %494 = vmatmul.bf16.gmra.mxu0 %v484
      %v495 = vpop.f32.mrf.mxu0
      %v496 = vadd.f32 0.0, %v495
      %v497 = vpop.f32.mrf.mxu0
      %498 = vdwg.mxu0
      %v499 = vmax.f32 %v496, 1e-24
      %v500 = vrsqrt.pop %v499
      %v501 = vmul.f32 %v500, %v499
      %v502 = vmul.f32 %v501, %v500
      %v503 = vmul.f32 0.5, %v502
      %v504 = vsub.f32 1.5, %v503
      %v505 = vmul.f32 %v500, %v504
      %vm506 = vweird.f32 %v499
      %vm507 = vweird.f32 %v500
      %vm508 = vmor %vm506, %vm507
      %v509 = vsel %vm508, %v500, %v505
      %v510 = vmul.f32 %v478, %v509
    $region26: #{routing_layer_pallas.1} parent=1 // loop_footer
      %s222 = sadd.s32 1, %s218
    $region27: #{routing_layer_pallas.1} parent=1 // loop_footer_branch
      %217 = sbr.rel target = $region23
    $region28: #{routing_layer_pallas.1} parent=1 // loop_exit
      _
    %v511 = vpack.c.bf16 %v223, %v223
    %vm512 = vcmask 64512
    %v514 = vsel %vm512, %v52, 0
    %v517 = vsel %vm512, %v53, 0
    %vm519 = vcmask 1043456
    %v521 = vsel %vm519, %v511, 0
    %523 = vmatpush.bf16.msra.mxu0 0
    %524 = vmatpush.bf16.msra.mxu0 0
    %525 = vmatpush.bf16.msra.mxu0 0
    %526 = vmatpush.bf16.msra.mxu0 0
    %527 = vmatpush.bf16.msra.mxu0 0
    %528 = vmatpush.bf16.msra.mxu0 0
    %529 = vmatpush.bf16.msra.mxu0 0
    %530 = vmatpush.bf16.msra.mxu0 %v521
    %531 = vmatmul.bf16.gmra.mxu0 %v514
    %v532 = vpop.f32.mrf.mxu0
    %v533 = vadd.f32 0.0, %v532
    %v534 = vpop.f32.mrf.mxu0
    %v535 = vadd.f32 0.0, %v534
    %536 = vmatmul.bf16.gmra.mxu0 %v517
    %v537 = vpop.f32.mrf.mxu0
    %v538 = vadd.f32 0.0, %v537
    %v539 = vpop.f32.mrf.mxu0
    %v540 = vadd.f32 0.0, %v539
    %541 = vdwg.mxu0
    %v542 = vmul.f32 %v533, %v151
    %v543 = vmul.f32 %v535, %v152
    %v544 = vmul.f32 %v538, %v153
    %v545 = vmul.f32 %v540, %v154
    %v546 = vpack.c.bf16 %v543, %v542
    %v547 = vpack.c.bf16 %v545, %v544
    %v549 = vsel %vm81, %v546, 0
    %v552 = vsel %vm81, %v547, 0
    %554 = vmatpush.bf16.msra.mxu0 0
    %555 = vmatpush.bf16.msra.mxu0 0
    %556 = vmatpush.bf16.msra.mxu0 0
    %557 = vmatpush.bf16.msra.mxu0 0
    %558 = vmatpush.bf16.msra.mxu0 0
    %559 = vmatpush.bf16.msra.mxu0 0
    %560 = vmatpush.bf16.msra.mxu0 %v78
    %561 = vmatpush.bf16.msra.mxu0 %v77
    %562 = vmatmul.bf16.gmra.mxu0 %v549
    %v563 = vpop.f32.mrf.mxu0
    %v564 = vadd.f32 0.0, %v563
    %v565 = vpop.f32.mrf.mxu0
    %v566 = vadd.f32 0.0, %v565
    %567 = vmatmul.bf16.gmra.mxu0 %v552
    %v568 = vpop.f32.mrf.mxu0
    %v569 = vadd.f32 0.0, %v568
    %v570 = vpop.f32.mrf.mxu0
    %v571 = vadd.f32 0.0, %v570
    %572 = vdwg.mxu0
    %v573 = vpack.c.bf16 %v566, %v564
    %v574 = vpack.c.bf16 %v571, %v569
    %575 = vmatpush.bf16.msra.mxu0 0
    %576 = vmatpush.bf16.msra.mxu0 0
    %577 = vmatpush.bf16.msra.mxu0 0
    %578 = vmatpush.bf16.msra.mxu0 0
    %579 = vmatpush.bf16.msra.mxu0 0
    %580 = vmatpush.bf16.msra.mxu0 0
    %581 = vmatpush.bf16.msra.mxu0 %v574
    %582 = vmatpush.bf16.msra.mxu0 %v573
    %583 = vmatmul.bf16.gmra.mxu0 %v202
    %v584 = vpop.f32.mrf.mxu0
    %v585 = vadd.f32 0.0, %v584
    %v586 = vpop.f32.mrf.mxu0
    %587 = vdwg.mxu0
    %589 = vset.pattern.permute.xlu0 0
    %590 = vperm.xlu0 %589, %v58
    %v591 = vpop.permute.xlu0 %590
    %v593 = vmul.f32 %v585, %v591
    %v594 = vpack.c.bf16 %v593, %v593
    %v596 = vsel %vm519, %v594, 0
    %598 = vmatpush.bf16.msra.mxu0 0
    %599 = vmatpush.bf16.msra.mxu0 0
    %600 = vmatpush.bf16.msra.mxu0 0
    %601 = vmatpush.bf16.msra.mxu0 0
    %602 = vmatpush.bf16.msra.mxu0 0
    %603 = vmatpush.bf16.msra.mxu0 0
    %604 = vmatpush.bf16.msra.mxu0 0
    %605 = vmatpush.bf16.msra.mxu0 %v596
    %606 = vmatmul.bf16.gmra.mxu0 %v514
    %v607 = vpop.f32.mrf.mxu0
    %v608 = vadd.f32 0.0, %v607
    %v609 = vpop.f32.mrf.mxu0
    %v610 = vadd.f32 0.0, %v609
    %611 = vmatmul.bf16.gmra.mxu0 %v517
    %v612 = vpop.f32.mrf.mxu0
    %v613 = vadd.f32 0.0, %v612
    %v614 = vpop.f32.mrf.mxu0
    %v615 = vadd.f32 0.0, %v614
    %616 = vdwg.mxu0
    %v617 = vsub.f32 %v564, %v608
    %v618 = vsub.f32 %v566, %v610
    %v619 = vsub.f32 %v569, %v613
    %v620 = vsub.f32 %v571, %v615
    %v621 = vmul.f32 %v617, 1.442695
    %v622 = vpow.pop %v621
    %v623 = vmul.f32 %v618, 1.442695
    %v624 = vpow.pop %v623
    %v625 = vmul.f32 %v619, 1.442695
    %v626 = vpow.pop %v625
    %v627 = vmul.f32 %v620, 1.442695
    %v628 = vpow.pop %v627
    %v629 = vpack.c.bf16 %v624, %v622
    %v630 = vpack.c.bf16 %v628, %v626
    %631 = vmatpush.bf16.msra.mxu0 0
    %632 = vmatpush.bf16.msra.mxu0 0
    %633 = vmatpush.bf16.msra.mxu0 0
    %634 = vmatpush.bf16.msra.mxu0 0
    %635 = vmatpush.bf16.msra.mxu0 0
    %636 = vmatpush.bf16.msra.mxu0 0
    %637 = vmatpush.bf16.msra.mxu0 %v630
    %638 = vmatpush.bf16.msra.mxu0 %v629
    %639 = vmatmul.bf16.gmra.mxu0 %v202
    %v640 = vpop.f32.mrf.mxu0
    %v641 = vadd.f32 0.0, %v640
    %v642 = vpop.f32.mrf.mxu0
    %643 = vdwg.mxu0
    %v644 = vpack.c.bf16 %v641, %v641
    %v646 = vsel %vm519, %v644, 0
    %648 = vmatpush.bf16.msra.mxu0 0
    %649 = vmatpush.bf16.msra.mxu0 0
    %650 = vmatpush.bf16.msra.mxu0 0
    %651 = vmatpush.bf16.msra.mxu0 0
    %652 = vmatpush.bf16.msra.mxu0 0
    %653 = vmatpush.bf16.msra.mxu0 0
    %654 = vmatpush.bf16.msra.mxu0 0
    %655 = vmatpush.bf16.msra.mxu0 %v646
    %656 = vmatmul.bf16.gmra.mxu0 %v514
    %v657 = vpop.f32.mrf.mxu0
    %v658 = vadd.f32 0.0, %v657
    %v659 = vpop.f32.mrf.mxu0
    %v660 = vadd.f32 0.0, %v659
    %661 = vmatmul.bf16.gmra.mxu0 %v517
    %v662 = vpop.f32.mrf.mxu0
    %v663 = vadd.f32 0.0, %v662
    %v664 = vpop.f32.mrf.mxu0
    %v665 = vadd.f32 0.0, %v664
    %666 = vdwg.mxu0
    %v667 = vmax.f32 %v658, 1e-30
    %v668 = vmax.f32 %v660, 1e-30
    %v669 = vmax.f32 %v663, 1e-30
    %v670 = vmax.f32 %v665, 1e-30
    %v671 = vrcp.pop %v667
    %v672 = vrcp.pop %v668
    %v673 = vrcp.pop %v669
    %v674 = vrcp.pop %v670
    %v675 = vmul.f32 %v622, %v671
    %v676 = vmul.f32 %v624, %v672
    %v677 = vmul.f32 %v626, %v673
    %v678 = vmul.f32 %v628, %v674
    %v679 = vmul.f32 %v675, 0.5
    %v680 = vmul.f32 %v676, 0.5
    %v681 = vmul.f32 %v677, 0.5
    %v682 = vmul.f32 %v678, 0.5
    %v683 = vmul.f32 %v162, 0.5
    %v684 = vmul.f32 %v167, 0.5
    %v685 = vmul.f32 %v172, 0.5
    %v686 = vmul.f32 %v177, 0.5
    %v687 = vadd.f32 %v679, %v683
    %v688 = vadd.f32 %v680, %v684
    %v689 = vadd.f32 %v681, %v685
    %v690 = vadd.f32 %v682, %v686
    %v691 = vmul.f32 %v687, 1.442695
    %v692 = vpow.pop %v691
    %v693 = vmul.f32 %v688, 1.442695
    %v694 = vpow.pop %v693
    %v695 = vmul.f32 %v689, 1.442695
    %v696 = vpow.pop %v695
    %v697 = vmul.f32 %v690, 1.442695
    %v698 = vpow.pop %v697
    %v699 = vpack.c.bf16 %v694, %v692
    %v700 = vpack.c.bf16 %v698, %v696
    %701 = vmatpush.bf16.msra.mxu0 0
    %702 = vmatpush.bf16.msra.mxu0 0
    %703 = vmatpush.bf16.msra.mxu0 0
    %704 = vmatpush.bf16.msra.mxu0 0
    %705 = vmatpush.bf16.msra.mxu0 0
    %706 = vmatpush.bf16.msra.mxu0 0
    %707 = vmatpush.bf16.msra.mxu0 %v700
    %708 = vmatpush.bf16.msra.mxu0 %v699
    %709 = vmatmul.bf16.gmra.mxu0 %v202
    %v710 = vpop.f32.mrf.mxu0
    %v711 = vadd.f32 0.0, %v710
    %v712 = vpop.f32.mrf.mxu0
    %713 = vdwg.mxu0
    %v714 = vpack.c.bf16 %v711, %v711
    %v716 = vsel %vm519, %v714, 0
    %718 = vmatpush.bf16.msra.mxu0 0
    %719 = vmatpush.bf16.msra.mxu0 0
    %720 = vmatpush.bf16.msra.mxu0 0
    %721 = vmatpush.bf16.msra.mxu0 0
    %722 = vmatpush.bf16.msra.mxu0 0
    %723 = vmatpush.bf16.msra.mxu0 0
    %724 = vmatpush.bf16.msra.mxu0 0
    %725 = vmatpush.bf16.msra.mxu0 %v716
    %726 = vmatmul.bf16.gmra.mxu0 %v514
    %v727 = vpop.f32.mrf.mxu0
    %v728 = vadd.f32 0.0, %v727
    %v729 = vpop.f32.mrf.mxu0
    %v730 = vadd.f32 0.0, %v729
    %731 = vmatmul.bf16.gmra.mxu0 %v517
    %v732 = vpop.f32.mrf.mxu0
    %v733 = vadd.f32 0.0, %v732
    %v734 = vpop.f32.mrf.mxu0
    %v735 = vadd.f32 0.0, %v734
    %736 = vdwg.mxu0
    %v737 = vmax.f32 %v728, 1e-30
    %v738 = vmax.f32 %v730, 1e-30
    %v739 = vmax.f32 %v733, 1e-30
    %v740 = vmax.f32 %v735, 1e-30
    %v741 = vrcp.pop %v737
    %v742 = vrcp.pop %v738
    %v743 = vrcp.pop %v739
    %v744 = vrcp.pop %v740
    %v745 = vmul.f32 %v692, %v741
    %v746 = vmul.f32 %v694, %v742
    %v747 = vmul.f32 %v696, %v743
    %v748 = vmul.f32 %v698, %v744
    %v749 = vmul.f32 %v151, %v745
    %v750 = vmul.f32 %v152, %v746
    %v751 = vmul.f32 %v153, %v747
    %v752 = vmul.f32 %v154, %v748
    %v753 = vpack.c.bf16 %v750, %v749
    %v754 = vpack.c.bf16 %v752, %v751
    %755 = vmatpush.bf16.msra.mxu0 0
    %756 = vmatpush.bf16.msra.mxu0 0
    %757 = vmatpush.bf16.msra.mxu0 0
    %758 = vmatpush.bf16.msra.mxu0 0
    %759 = vmatpush.bf16.msra.mxu0 0
    %760 = vmatpush.bf16.msra.mxu0 0
    %761 = vmatpush.bf16.msra.mxu0 %v754
    %762 = vmatpush.bf16.msra.mxu0 %v753
    %763 = vmatmul.bf16.gmra.mxu0 %v202
    %v764 = vpop.f32.mrf.mxu0
    %v765 = vadd.f32 0.0, %v764
    %v766 = vpop.f32.mrf.mxu0
    %767 = vdwg.mxu0
    %768 = vst.msk [vmem:[#allocation2] sm:$0xff] %vm81, %v765
    // Predicated region
    $region29: #{routing_layer_pallas.1} parent=1 // pred_check
      _
    $region30: #{routing_layer_pallas.1} parent=1 // pred_check_branch
      %770 = sbr.rel (0) target = $region32
    $region31: #{routing_layer_pallas.1} parent=1 // pred_region
      %772 = vsyncadd [#allocation3], 0
      %s774 = sshll.u32 [#allocation2], 4
      %s775 = int_to_ptr.vmem [resolvable:$true] %s774
      %s776 = sshll.u32 %s5, 4
      %s777 = int_to_ptr.hbm [resolvable:$true] %s776
      %779 = dma.vmem_to_hbm [thread:$0]  %s775, 128, %s777, [#allocation3]
    $region32: #{routing_layer_pallas.1} parent=1 // pred_fallthru
      _
    // Predicated region
    $region33: #{routing_layer_pallas.1} parent=1 // pred_check
      _
    $region34: #{routing_layer_pallas.1} parent=1 // pred_check_branch
      %781 = sbr.rel (0) target = $region36
    $region35: #{routing_layer_pallas.1} parent=1 // pred_region
      %783 = dma.done [#allocation3], 128
    $region36: #{routing_layer_pallas.1} parent=1 // pred_fallthru
      _
    %784 = vsyncpa [#allocation3], 1

</llo_original>
